<compile_context>
chip_gen: v7x
topology: tpu7x:2x2x1
jax: 0.10.0
libtpu: 0.0.40
codegen_flags: <defaults>
</compile_context>

<pallas_src>
import functools

import numpy as np
import jax
import jax.numpy as jnp
from jax import lax
from jax.experimental import pallas as pl
from jax.experimental.pallas import tpu as pltpu

_EPS = 1e-5


def _round_up(v, m):
    return (v + m - 1) // m * m


def _subpixel_entries():
    """Static tap schedule for ConvTranspose3d(k=3, stride=2, padding=1, output_padding=1).

    Along each axis, output position 2*t + p takes:
      p == 0 : kernel tap 1 applied to input t
      p == 1 : kernel tap 2 applied to input t, and kernel tap 0 applied to input t+1
    Returns 27 entries (od, oh, ow, parity_index, kd, kh, kw); the input offset (od, oh, ow)
    takes only 8 distinct values -> only 8 shifted views of the stage-1 activation are built.
    """
    axis_opts = {0: ((1, 0),), 1: ((2, 0), (0, 1))}
    entries = []
    for pd in (0, 1):
        for ph in (0, 1):
            for pw in (0, 1):
                for kd, od in axis_opts[pd]:
                    for kh, oh in axis_opts[ph]:
                        for kw, ow in axis_opts[pw]:
                            entries.append((od, oh, ow, pd * 4 + ph * 2 + pw, kd, kh, kw))
    return tuple(entries)


@functools.lru_cache(maxsize=None)
def _roll_moves_right():
    """True if pltpu.roll follows the jnp.roll convention: out[i] = x[(i - shift) % n]."""
    def kern(x_ref, o_ref):
        o_ref[...] = pltpu.roll(x_ref[...], 1, 1)

    x = jnp.tile(jnp.arange(128, dtype=jnp.float32)[None, :], (8, 1))
    y = pl.pallas_call(kern, out_shape=jax.ShapeDtypeStruct((8, 128), jnp.float32))(x)
    first = float(y[0, 0])
    if first == 127.0:
        return True
    if first == 1.0:
        return False
    raise RuntimeError(f"unexpected pltpu.roll convention (probe value {first})")


def _shift_cols(v, off, width, roll_right):
    """Return v[:, off:off+width] (static off) via the XLU rotate; slices stay lane-aligned."""
    if off == 0:
        return v[:, :width]
    full = v.shape[-1]
    amount = (full - off) if roll_right else off
    return pltpu.roll(v, amount, 1)[:, :width]


# --------------------------------- fused Pallas kernel ---------------------------------

def _decoder_block_kernel(sd, sh, roll_right,
                          x_ref, w1_ref, b1_ref, mask_ref, w2_ref, b2_ref, o_ref):
    ly = mask_ref.shape[-1]          # columns computed for the stage-1 activation
    lout = o_ref.shape[-1]           # columns computed for the stage-2 output
    cmid = w1_ref.shape[1]
    cout = w2_ref.shape[1]

    # ---- stage 1: Conv3d(k=3, s=1, p=1) (+ folded BN) + ReLU: 27 tap matmuls ----
    x_full = x_ref[...].astype(jnp.float32)            # (Cin, LX); shifts done in f32
    acc1 = jnp.zeros((cmid, ly), jnp.float32)
    for kd in range(3):
        for kh in range(3):
            for kw in range(3):
                off = kd * sd + kh * sh + kw
                xs = _shift_cols(x_full, off, ly, roll_right).astype(jnp.bfloat16)
                w_tap = w1_ref[kd * 9 + kh * 3 + kw]    # (Cmid, Cin) bf16
                acc1 = acc1 + jnp.dot(w_tap, xs, preferred_element_type=jnp.float32)
    # bias + ReLU in f32; the mask zeroes the padding ring so stage 2's t+1 taps read zeros.
    y1 = jnp.maximum(acc1 + b1_ref[...], 0.0) * mask_ref[...]        # (Cmid, LY) f32

    # ---- stage 2: ConvTranspose3d(k=3, s=2, p=1, op=1) (+ folded BN) + ReLU ----
    # sub-pixel decomposition: 8 shifted views of y1, 27 tap matmuls in total.
    shifted = {}
    for od in (0, 1):
        for oh in (0, 1):
            for ow in (0, 1):
                off = od * sd + oh * sh + ow
                shifted[(od, oh, ow)] = (
                    _shift_cols(y1, off, lout, roll_right).astype(jnp.bfloat16))

    b2 = b2_ref[...]                                    # (Cout, 1) f32
    for par in range(8):
        acc2 = jnp.zeros((cout, lout), jnp.float32)
        for j, (od, oh, ow, p_j, _, _, _) in enumerate(_subpixel_entries()):
            if p_j != par:
                continue
            acc2 = acc2 + jnp.dot(w2_ref[j], shifted[(od, oh, ow)],
                                  preferred_element_type=jnp.float32)
        o_ref[par, :, :] = jnp.maximum(acc2 + b2, 0.0)


# --------------------------------------- wrapper ---------------------------------------

def decoder_block_forward(x, params, *, stride=None):
    """Forward pass of DecoderBlock: (N, Cin, D, H, W) -> (N, Cout, 2D, 2H, 2W)."""
    if stride is not None:
        # TODO(synk): only the default ConvTranspose3d stride=(2,2,2)/output_padding=(1,1,1)
        # path is implemented; the custom-stride constructor variant is not.
        raise NotImplementedError("custom stride not supported by this Pallas kernel")

    N, Cin, D, H, W = x.shape
    Cmid = params["w1"].shape[0]
    Cout = params["wt"].shape[1]

    Dp, Hp, Wp = D + 2, H + 2, W + 2
    SD, SH = Hp * Wp, Wp                      # flat strides of the common padded grid
    L = Dp * Hp * Wp
    HALO = SD + SH + 1
    HALO_R = _round_up(HALO, 128)
    LOUT = _round_up(L, 128)                  # stage-2 output columns
    LY = LOUT + HALO_R                        # stage-1 activation columns
    LX = LY + 2 * HALO_R                      # padded/flattened input columns

    # ---- fold BatchNorm (eval mode) into the conv weights / biases ----
    sc1 = params["g1"] / jnp.sqrt(params["v1"] + _EPS)
    b1c = (params["be1"] + sc1 * (params["b1"] - params["m1"])
           ).reshape(Cmid, 1).astype(jnp.float32)
    w1e = params["w1"] * sc1[:, None, None, None, None]            # (Cmid, Cin, 3,3,3)
    w1_taps = jnp.transpose(w1e, (2, 3, 4, 0, 1)).reshape(27, Cmid, Cin).astype(jnp.bfloat16)

    sc2 = params["g2"] / jnp.sqrt(params["v2"] + _EPS)
    b2c = (params["be2"] + sc2 * (params["b2"] - params["m2"])
           ).reshape(Cout, 1).astype(jnp.float32)
    wte = params["wt"] * sc2[None, :, None, None, None]            # (Cmid, Cout, 3,3,3)
    wt_t = jnp.transpose(wte, (2, 3, 4, 1, 0))                     # (kd, kh, kw, Cout, Cmid)
    entries = _subpixel_entries()
    kidx = np.array([(e[4], e[5], e[6]) for e in entries], dtype=np.int32)
    w2_taps = wt_t[kidx[:, 0], kidx[:, 1], kidx[:, 2]].astype(jnp.bfloat16)  # (27, Cout, Cmid)

    # ---- flatten x into the common zero-padded grid (+ halo), bf16 for HBM/MXU ----
    xg = jnp.pad(x, ((0, 0), (0, 0), (1, 1), (1, 1), (1, 1))).reshape(N, Cin, L)
    x_ext = jnp.pad(xg, ((0, 0), (0, 0), (HALO, LX - L - HALO))).astype(jnp.bfloat16)

    # interior mask (static): 1 on valid voxels of the padded grid, 0 on the padding ring
    mgrid = np.zeros((Dp, Hp, Wp), np.float32)
    mgrid[1:D + 1, 1:H + 1, 1:W + 1] = 1.0
    mask_np = np.zeros((1, LY), np.float32)
    mask_np[0, :L] = mgrid.reshape(-1)
    mask = jnp.asarray(mask_np)

    roll_right = _roll_moves_right()
    kernel = functools.partial(_decoder_block_kernel, SD, SH, roll_right)

    out = pl.pallas_call(
        kernel,
        out_shape=jax.ShapeDtypeStruct((N, 8, Cout, LOUT), jnp.float32),
        grid_spec=pltpu.PrefetchScalarGridSpec(
            num_scalar_prefetch=0,
            grid=(N,),
            in_specs=[
                pl.BlockSpec((None, Cin, LX), lambda n: (n, 0, 0)),
                pl.BlockSpec((27, Cmid, Cin), lambda n: (0, 0, 0)),
                pl.BlockSpec((Cmid, 1), lambda n: (0, 0)),
                pl.BlockSpec((1, LY), lambda n: (0, 0)),
                pl.BlockSpec((27, Cout, Cmid), lambda n: (0, 0, 0)),
                pl.BlockSpec((Cout, 1), lambda n: (0, 0)),
            ],
            out_specs=pl.BlockSpec((None, 8, Cout, LOUT), lambda n: (n, 0, 0, 0)),
        ),
        compiler_params=pltpu.CompilerParams(
            dimension_semantics=("parallel",),
            vmem_limit_bytes=32 * 1024 * 1024,
        ),
    )(x_ext, w1_taps, b1c, mask, w2_taps, b2c)

    # ---- un-flatten: drop the padding ring and interleave the 8 output parities ----
    val = out[:, :, :, :L].reshape(N, 8, Cout, Dp, Hp, Wp)[:, :, :, 1:D + 1, 1:H + 1, 1:W + 1]
    val = val.reshape(N, 2, 2, 2, Cout, D, H, W)
    val = jnp.transpose(val, (0, 4, 5, 1, 6, 2, 7, 3))     # (N, Cout, D, pd, H, ph, W, pw)
    return val.reshape(N, Cout, 2 * D, 2 * H, 2 * W)


# ------------------------------- pure-XLA reference ------------------------------------

def reference_forward(x, p, compute_dtype=jnp.float32):
    """XLA reference.  compute_dtype=bfloat16 mirrors the kernel's operand quantization."""
    dn = ("NCDHW", "OIDHW", "NCDHW")
    cd = compute_dtype

    sc1 = p["g1"] / jnp.sqrt(p["v1"] + _EPS)
    b1e = p["be1"] + sc1 * (p["b1"] - p["m1"])
    w1e = (p["w1"] * sc1[:, None, None, None, None]).astype(cd)
    y = lax.conv_general_dilated(x.astype(cd), w1e, (1, 1, 1), [(1, 1)] * 3,
                                 dimension_numbers=dn,
                                 preferred_element_type=jnp.float32)
    y = jnp.maximum(y + b1e[None, :, None, None, None], 0.0)

    sc2 = p["g2"] / jnp.sqrt(p["v2"] + _EPS)
    b2e = p["be2"] + sc2 * (p["b2"] - p["m2"])
    wte = p["wt"] * sc2[None, :, None, None, None]
    w2_eq = jnp.transpose(jnp.flip(wte, (2, 3, 4)), (1, 0, 2, 3, 4)).astype(cd)
    z = lax.conv_general_dilated(y.astype(cd), w2_eq, (1, 1, 1), [(1, 2)] * 3,
                                 lhs_dilation=(2, 2, 2), dimension_numbers=dn,
                                 preferred_element_type=jnp.float32)
    return jnp.maximum(z + b2e[None, :, None, None, None], 0.0)


# ----------------------------------------- main ----------------------------------------

if __name__ == "__main__":
    key = jax.random.PRNGKey(0)
    N, Cin, D, H, W = 2, 4, 8, 8, 8
    Cmid, Cout = 8, 4
    ks = jax.random.split(key, 13)

    x = jax.random.normal(ks[0], (N, Cin, D, H, W), jnp.float32)

    params = {
        # Conv3d(in->mid, k=3, s=1, p=1) weight/bias
        "w1": 0.1 * jax.random.normal(ks[1], (Cmid, Cin, 3, 3, 3), jnp.float32),
        "b1": 0.1 * jax.random.normal(ks[2], (Cmid,), jnp.float32),
        # BatchNorm3d(mid): gamma, beta, running_mean, running_var
        "g1": 1.0 + 0.1 * jax.random.normal(ks[3], (Cmid,), jnp.float32),
        "be1": 0.1 * jax.random.normal(ks[4], (Cmid,), jnp.float32),
        "m1": 0.1 * jax.random.normal(ks[5], (Cmid,), jnp.float32),
        "v1": 0.8 + 0.4 * jax.random.uniform(ks[6], (Cmid,), jnp.float32),
        # ConvTranspose3d(mid->out, k=3, s=(2,2,2), p=1, output_padding=(1,1,1))
        "wt": 0.1 * jax.random.normal(ks[7], (Cmid, Cout, 3, 3, 3), jnp.float32),
        "b2": 0.1 * jax.random.normal(ks[8], (Cout,), jnp.float32),
        # BatchNorm3d(out)
        "g2": 1.0 + 0.1 * jax.random.normal(ks[9], (Cout,), jnp.float32),
        "be2": 0.1 * jax.random.normal(ks[10], (Cout,), jnp.float32),
        "m2": 0.1 * jax.random.normal(ks[11], (Cout,), jnp.float32),
        "v2": 0.8 + 0.4 * jax.random.uniform(ks[12], (Cout,), jnp.float32),
    }

    out = jax.block_until_ready(decoder_block_forward(x, params))
    assert out.shape == (N, Cout, 2 * D, 2 * H, 2 * W), out.shape

    # structural check against an XLA reference using the same bf16 operand quantization
    ref_bf = jax.block_until_ready(reference_forward(x, params, jnp.bfloat16))
    np.testing.assert_allclose(np.asarray(out), np.asarray(ref_bf), atol=5e-3, rtol=5e-3)

    # sanity check against the full-f32 reference (difference = bf16 operand rounding only)
    ref_f32 = jax.block_until_ready(reference_forward(x, params, jnp.float32))
    np.testing.assert_allclose(np.asarray(out), np.asarray(ref_f32), atol=1.5e-1, rtol=1.5e-1)

    print("KERNEL_OK")
</pallas_src>

<mosaic_0001>
module attributes {stable_mosaic.version = 11 : i64} {
  func.func @kern(%arg0: memref<8x128xf32, #tpu.memory_space<vmem>>, %arg1: memref<8x128xf32, #tpu.memory_space<vmem>>) attributes {dimension_semantics = [], scalar_prefetch = 0 : i64, scratch_operands = 0 : i64, tpu.core_type = #tpu.core_type<tc>} {
    %c0 = arith.constant 0 : index
    %c0_0 = arith.constant 0 : index
    %0 = vector.load %arg0[%c0, %c0_0] : memref<8x128xf32, #tpu.memory_space<vmem>>, vector<8x128xf32>
    %c1_i32 = arith.constant 1 : i32
    %1 = tpu.dynamic_rotate %0 by %c1_i32 dim 1 : vector<8x128xf32>, i32 -> vector<8x128xf32>
    %c0_1 = arith.constant 0 : index
    %c0_2 = arith.constant 0 : index
    %2 = vector.load %arg1[%c0_1, %c0_2] : memref<8x128xf32, #tpu.memory_space<vmem>>, vector<8x128xf32>
    tpu.vector_store %arg1[%c0_1, %c0_2], %1 {strides = array<i32>} : memref<8x128xf32, #tpu.memory_space<vmem>>, vector<8x128xf32>,
    return
  }
}

</mosaic_0001>

<llo_original>
// kernel: tpu_custom_call.1
$region0: #{tpu_custom_call.1}
  #allocation0 [shape = 'u32[]', space=smem, size = 0x4, offset = 0x4, fixed_abs, tag = 'smem constant byte address 0x4 - core index']
  #allocation1 [shape = 'u32[144,128]{1,0:T(1,128)}', space=vmem, size = 0x12000, scoped, tag = 'internal scratch']
  %s0 = inlined_call_operand.hbm [shape: f32[8,128], index: 0, kind: input, shape index: {}]
  %s1 = inlined_call_operand.hbm [shape: f32[8,128], index: 1, kind: output, shape index: {}]
  %s2 = sld [smem:[#allocation0]]
  $region18: #{tpu_custom_call.1} parent=0
    _
  %s4 = ssub.s32 1, %s2
  %s5 = scalar_select 0, %s4, %s2
  $region1: #{tpu_custom_call.1} parent=0
    #allocation2 [shape = 'u8[4096]{0}', space=vmem, size = 0x1000, scoped, tag = 'input window, operand 0, single buffered']
    #allocation3 [shape = 's32[1]{0}', space=sflag, size = 0x4, scoped, tag = 'scoped memory for tpu_custom_call.1']
    #allocation4 [shape = 's32[1]{0}', space=sflag, size = 0x4, scoped, tag = 'scoped memory for tpu_custom_call.1']
    #allocation5 [shape = 'u8[4096]{0}', space=vmem, size = 0x1000, scoped, tag = 'output window, operand 0, single buffered']
    %6 = vsyncpa [#allocation3], 0
    %7 = vsyncpa [#allocation4], 0
    // Predicated region
    $region2: #{tpu_custom_call.1} parent=1 // pred_check
      _
    $region3: #{tpu_custom_call.1} parent=1 // pred_check_branch
      %9 = sbr.rel (0) target = $region5
    $region4: #{tpu_custom_call.1} parent=1 // pred_region
      %s11 = ssub.s32 128, 128
      %12 = vsyncadd [#allocation3], %s11
      %s14 = sshll.u32 [#allocation2], 4
      %s15 = int_to_ptr.vmem [resolvable:$true] %s14
      %17 = dma.hbm_to_vmem [thread:$0]  %s0, 128, %s15, [#allocation3]
    $region5: #{tpu_custom_call.1} parent=1 // pred_fallthru
      _
    // Predicated region
    $region6: #{tpu_custom_call.1} parent=1 // pred_check
      _
    $region7: #{tpu_custom_call.1} parent=1 // pred_check_branch
      %19 = sbr.rel (0) target = $region9
    $region8: #{tpu_custom_call.1} parent=1 // pred_region
      %20 = dma.done [#allocation3], 128
    $region9: #{tpu_custom_call.1} parent=1 // pred_fallthru
      _
    %v21 = vld [vmem:[#allocation2] sm:$0xff]
    %22 = vrot.lane.b32.xlu0 %v21, 1
    %v23 = vpop.permute.xlu0 %22
    %24 = vst [vmem:[#allocation5] sm:$0xff] %v23
    // Predicated region
    $region10: #{tpu_custom_call.1} parent=1 // pred_check
      _
    $region11: #{tpu_custom_call.1} parent=1 // pred_check_branch
      %26 = sbr.rel (0) target = $region13
    $region12: #{tpu_custom_call.1} parent=1 // pred_region
      %s28 = ssub.s32 128, 128
      %29 = vsyncadd [#allocation4], %s28
      %s31 = sshll.u32 [#allocation5], 4
      %s32 = int_to_ptr.vmem [resolvable:$true] %s31
      %34 = dma.vmem_to_hbm [thread:$0]  %s32, 128, %s1, [#allocation4]
    $region13: #{tpu_custom_call.1} parent=1 // pred_fallthru
      _
    // Predicated region
    $region14: #{tpu_custom_call.1} parent=1 // pred_check
      _
    $region15: #{tpu_custom_call.1} parent=1 // pred_check_branch
      %36 = sbr.rel (0) target = $region17
    $region16: #{tpu_custom_call.1} parent=1 // pred_region
      %37 = dma.done [#allocation4], 128
    $region17: #{tpu_custom_call.1} parent=1 // pred_fallthru
      _
    %38 = vsyncpa [#allocation3], 1
    %39 = vsyncpa [#allocation4], 1

</llo_original>
